<compile_context>
chip_gen: v5e
topology: v5e:2x2
jax: 0.10.0
libtpu: 0.0.40
codegen_flags: <defaults>
</compile_context>

<pallas_src>
import jax
import jax.numpy as jnp
import numpy as np
from jax import lax
from jax.experimental import pallas as pl
from jax.experimental.pallas import tpu as pltpu

EPS = 1e-5
LANE = 128


# ----------------------------- Pass 1 kernel --------------------------------
# Accumulate per-channel sum and sum-of-squares of z = W @ x (no bias) over the
# spatial tiles of one batch element.  Accumulators live in VMEM scratch; the
# tiny (Cout,1) outputs are written once, on the last spatial tile.
def _stats_kernel(x_ref, w_ref, sum_ref, sq_ref, sum_acc, sq_acc):
    j = pl.program_id(1)

    @pl.when(j == 0)
    def _():
        sum_acc[...] = jnp.zeros_like(sum_acc)
        sq_acc[...] = jnp.zeros_like(sq_acc)

    # (Cout, Cin) @ (Cin, TS) -> (Cout, TS) on the MXU, f32 accumulation.
    z = jnp.dot(w_ref[...], x_ref[0], preferred_element_type=jnp.float32)
    sum_acc[...] += jnp.sum(z, axis=-1, keepdims=True)
    sq_acc[...] += jnp.sum(z * z, axis=-1, keepdims=True)

    @pl.when(j == pl.num_programs(1) - 1)
    def _():
        sum_ref[0] = sum_acc[...]
        sq_ref[0] = sq_acc[...]


# ----------------------------- Pass 2 kernel --------------------------------
# out = (W_scaled @ x) + shift, where W_scaled = gamma*inv_std * W and
# shift = beta - mean_z * gamma*inv_std (the conv bias cancels analytically).
def _conv_bn_kernel(x_ref, ws_ref, shift_ref, o_ref):
    z = jnp.dot(ws_ref[...], x_ref[0], preferred_element_type=jnp.float32)
    o_ref[0] = (z + shift_ref[...]).astype(o_ref.dtype)


# ------------------------------ Tiling helper --------------------------------
def _spatial_tiling(s, cin, cout, vmem_block_budget_bytes=8 << 20):
    """Pick a lane-dense spatial tile (multiple of 128) under a VMEM budget.

    Budget covers the double-buffered f32 x-input and output tiles; 8 MiB keeps
    us comfortably below the default scoped-VMEM limit and v7x's 64 MiB VMEM.
    """
    bytes_per_col = 4 * 2 * (cin + cout)          # double-buffered in + out, f32
    ts_max = (vmem_block_budget_bytes // bytes_per_col) // LANE * LANE
    ts_max = max(LANE, min(ts_max, 8192))
    s_lane = pl.cdiv(s, LANE)                     # spatial extent in 128-lane units
    num_tiles = pl.cdiv(s_lane, ts_max // LANE)
    ts = pl.cdiv(s_lane, num_tiles) * LANE        # balanced -> minimal padding
    return ts, ts * num_tiles, num_tiles


# ------------------------------ Wrapper --------------------------------------
def resample_channels_forward(x_nchw, conv_w, conv_b, bn_gamma, bn_beta):
    """x_nchw: (N, Cin, H, W) f32.  conv_w: (Cout, Cin, 1, 1).  conv_b: (Cout,)."""
    del conv_b  # cancels analytically under training-mode BatchNorm
    n, cin, h, w = x_nchw.shape
    cout = conv_w.shape[0]
    s = h * w

    # Free reshape: keep NCHW-native layout, spatial on the lane axis.
    x3 = x_nchw.reshape(n, cin, s).astype(jnp.float32)

    ts, s_pad, num_tiles = _spatial_tiling(s, cin, cout)
    if s_pad != s:
        # Zero padding contributes nothing to the (bias-free) z statistics.
        x3 = jnp.pad(x3, ((0, 0), (0, 0), (0, s_pad - s)))

    w2d = conv_w.reshape(cout, cin).astype(jnp.float32)

    grid = (n, num_tiles)
    m_total = n * s                       # valid elements per channel (N*H*W)
    m_comp = n * s_pad                    # actually computed elements

    # ---- Pass 1: per-batch partial channel statistics of z = W @ x ----
    flops_stats = 2 * m_comp * cin * cout + 3 * m_comp * cout
    bytes_stats = 4 * (m_comp * cin + cin * cout + 2 * n * cout)

    sum_z, sq_z = pl.pallas_call(
        _stats_kernel,
        out_shape=(
            jax.ShapeDtypeStruct((n, cout, 1), jnp.float32),
            jax.ShapeDtypeStruct((n, cout, 1), jnp.float32),
        ),
        grid_spec=pltpu.PrefetchScalarGridSpec(
            num_scalar_prefetch=0,
            grid=grid,
            in_specs=[
                pl.BlockSpec((1, cin, ts), lambda i, j: (i, 0, j)),
                pl.BlockSpec((cout, cin), lambda i, j: (0, 0)),
            ],
            out_specs=(
                pl.BlockSpec((1, cout, 1), lambda i, j: (i, 0, 0)),
                pl.BlockSpec((1, cout, 1), lambda i, j: (i, 0, 0)),
            ),
            scratch_shapes=[
                pltpu.VMEM((cout, 1), jnp.float32),
                pltpu.VMEM((cout, 1), jnp.float32),
            ],
        ),
        compiler_params=pltpu.CompilerParams(
            dimension_semantics=("parallel", "arbitrary")),
        cost_estimate=pl.CostEstimate(
            flops=flops_stats, transcendentals=0, bytes_accessed=bytes_stats),
    )(x3, w2d)

    # ---- Fold BN into a scaled weight + per-channel shift (tiny XLA ops) ----
    sum_c = jnp.sum(sum_z, axis=0)[:, 0]                    # (Cout,)
    sq_c = jnp.sum(sq_z, axis=0)[:, 0]                      # (Cout,)
    mean_z = sum_c / float(m_total)
    var = jnp.maximum(sq_c / float(m_total) - mean_z * mean_z, 0.0)
    inv_std = lax.rsqrt(var + EPS)
    scale = bn_gamma.astype(jnp.float32) * inv_std          # (Cout,)
    shift = bn_beta.astype(jnp.float32) - mean_z * scale    # (Cout,)
    w_scaled = w2d * scale[:, None]                         # (Cout, Cin)
    shift2d = shift[:, None]                                # (Cout, 1)

    # ---- Pass 2: recompute z, apply folded BN affine, write lane-dense out ----
    flops_out = 2 * m_comp * cin * cout + m_comp * cout
    bytes_out = 4 * (m_comp * cin + m_comp * cout + cin * cout + cout)

    out3 = pl.pallas_call(
        _conv_bn_kernel,
        out_shape=jax.ShapeDtypeStruct((n, cout, s_pad), jnp.float32),
        grid_spec=pltpu.PrefetchScalarGridSpec(
            num_scalar_prefetch=0,
            grid=grid,
            in_specs=[
                pl.BlockSpec((1, cin, ts), lambda i, j: (i, 0, j)),
                pl.BlockSpec((cout, cin), lambda i, j: (0, 0)),
                pl.BlockSpec((cout, 1), lambda i, j: (0, 0)),
            ],
            out_specs=pl.BlockSpec((1, cout, ts), lambda i, j: (i, 0, j)),
        ),
        compiler_params=pltpu.CompilerParams(
            dimension_semantics=("parallel", "parallel")),
        cost_estimate=pl.CostEstimate(
            flops=flops_out, transcendentals=0, bytes_accessed=bytes_out),
    )(x3, w_scaled, shift2d)

    if s_pad != s:
        out3 = out3[:, :, :s]
    return out3.reshape(n, cout, h, w)


# ------------------------------ Reference ------------------------------------
def reference_forward(x_nchw, conv_w, conv_b, bn_gamma, bn_beta):
    n, cin, h, w = x_nchw.shape
    cout = conv_w.shape[0]
    x2d = jnp.transpose(x_nchw, (0, 2, 3, 1)).reshape(-1, cin)
    y = x2d @ conv_w.reshape(cout, cin).T + conv_b
    mean = y.mean(axis=0)
    var = y.var(axis=0)  # biased, as in PyTorch training-mode BN normalization
    out = (y - mean) / jnp.sqrt(var + EPS) * bn_gamma + bn_beta
    return jnp.transpose(out.reshape(n, h, w, cout), (0, 3, 1, 2))


if __name__ == "__main__":
    key = jax.random.PRNGKey(0)
    k_x, k_w, k_b = jax.random.split(key, 3)

    N, Cin, Cout, H, W = 2, 4, 8, 16, 16

    x = jax.random.normal(k_x, (N, Cin, H, W), dtype=jnp.float32)

    # Shapes from Conv2d(Cin, Cout, 1) + BatchNorm2d(Cout).
    fan_in = Cin * 1 * 1
    bound = 1.0 / np.sqrt(fan_in)
    conv_w = jax.random.uniform(k_w, (Cout, Cin, 1, 1), jnp.float32, -bound, bound)
    conv_b = jax.random.uniform(k_b, (Cout,), jnp.float32, -bound, bound)
    bn_gamma = jnp.ones((Cout,), jnp.float32)
    bn_beta = jnp.zeros((Cout,), jnp.float32)

    fwd = jax.jit(resample_channels_forward)
    out = jax.block_until_ready(fwd(x, conv_w, conv_b, bn_gamma, bn_beta))
    ref = jax.block_until_ready(
        reference_forward(x, conv_w, conv_b, bn_gamma, bn_beta))

    np.testing.assert_allclose(np.asarray(out), np.asarray(ref), rtol=1e-4, atol=1e-4)
    assert out.shape == (N, Cout, H, W)
    print("KERNEL_OK")
</pallas_src>

<mosaic_0001>
module attributes {stable_mosaic.version = 11 : i64} {
  func.func @_stats_kernel(%arg0: i32, %arg1: i32, %arg2: memref<1x4x256xf32, #tpu.memory_space<vmem>>, %arg3: memref<8x4xf32, #tpu.memory_space<vmem>>, %arg4: memref<1x8x1xf32, #tpu.memory_space<vmem>>, %arg5: memref<1x8x1xf32, #tpu.memory_space<vmem>>, %arg6: memref<8x1xf32, #tpu.memory_space<vmem>>, %arg7: memref<8x1xf32, #tpu.memory_space<vmem>>) attributes {dimension_semantics = [#tpu.dimension_semantics<parallel>, #tpu.dimension_semantics<arbitrary>], iteration_bounds = array<i64: 2, 1>, scalar_prefetch = 0 : i64, scratch_operands = 2 : i64, tpu.core_type = #tpu.core_type<tc>, window_params = [{transform_indices = @transform_0, window_bounds = array<i64: 1, 4, 256>}, {pipeline_mode = #tpu.pipeline_mode<synchronous>, transform_indices = @transform_1, window_bounds = array<i64: 8, 4>}, {transform_indices = @transform_2, window_bounds = array<i64: 1, 8, 1>}, {transform_indices = @transform_3, window_bounds = array<i64: 1, 8, 1>}]} {
    %c0_i32 = arith.constant 0 : i32
    %0 = arith.cmpi eq, %arg1, %c0_i32 : i32
    %1 = arith.extui %0 : i1 to i32
    %c0_i32_0 = arith.constant 0 : i32
    %2 = arith.cmpi ne, %1, %c0_i32_0 : i32
    scf.if %2 {
      %cst_17 = arith.constant 0.000000e+00 : f32
      %21 = vector.broadcast %cst_17 : f32 to vector<8x1xf32>
      %c0_18 = arith.constant 0 : index
      %c0_19 = arith.constant 0 : index
      %22 = vector.load %arg6[%c0_18, %c0_19] : memref<8x1xf32, #tpu.memory_space<vmem>>, vector<8x1xf32>
      tpu.vector_store %arg6[%c0_18, %c0_19], %21 {strides = array<i32>} : memref<8x1xf32, #tpu.memory_space<vmem>>, vector<8x1xf32>,
      %cst_20 = arith.constant 0.000000e+00 : f32
      %23 = vector.broadcast %cst_20 : f32 to vector<8x1xf32>
      %c0_21 = arith.constant 0 : index
      %c0_22 = arith.constant 0 : index
      %24 = vector.load %arg7[%c0_21, %c0_22] : memref<8x1xf32, #tpu.memory_space<vmem>>, vector<8x1xf32>
      tpu.vector_store %arg7[%c0_21, %c0_22], %23 {strides = array<i32>} : memref<8x1xf32, #tpu.memory_space<vmem>>, vector<8x1xf32>,
    } else {
    }
    %c0 = arith.constant 0 : index
    %c0_1 = arith.constant 0 : index
    %3 = vector.load %arg3[%c0, %c0_1] : memref<8x4xf32, #tpu.memory_space<vmem>>, vector<8x4xf32>
    %c0_2 = arith.constant 0 : index
    %c0_3 = arith.constant 0 : index
    %c0_4 = arith.constant 0 : index
    %4 = vector.load %arg2[%c0_2, %c0_3, %c0_4] : memref<1x4x256xf32, #tpu.memory_space<vmem>>, vector<1x4x256xf32>
    %5 = vector.shape_cast %4 : vector<1x4x256xf32> to vector<4x256xf32>
    %cst = arith.constant dense<0.000000e+00> : vector<8x256xf32>
    %6 = tpu.matmul %3, %5, %cst {dimension_numbers = #tpu.dot_dimension_numbers<[1], [0], [0], [1], [0, 0, 1, 1], [], []>} : vector<8x4xf32>, vector<4x256xf32>, vector<8x256xf32> -> vector<8x256xf32>
    %c0_5 = arith.constant 0 : index
    %c0_6 = arith.constant 0 : index
    %7 = vector.load %arg6[%c0_5, %c0_6] : memref<8x1xf32, #tpu.memory_space<vmem>>, vector<8x1xf32>
    %cst_7 = arith.constant dense<0.000000e+00> : vector<8xf32>
    %8 = vector.multi_reduction <add>, %6, %cst_7 [1] : vector<8x256xf32> to vector<8xf32>
    %9 = vector.shape_cast %8 : vector<8xf32> to vector<8x1xf32>
    %10 = arith.addf %7, %9 : vector<8x1xf32>
    %c0_8 = arith.constant 0 : index
    %c0_9 = arith.constant 0 : index
    %11 = vector.load %arg6[%c0_8, %c0_9] : memref<8x1xf32, #tpu.memory_space<vmem>>, vector<8x1xf32>
    tpu.vector_store %arg6[%c0_8, %c0_9], %10 {strides = array<i32>} : memref<8x1xf32, #tpu.memory_space<vmem>>, vector<8x1xf32>,
    %c0_10 = arith.constant 0 : index
    %c0_11 = arith.constant 0 : index
    %12 = vector.load %arg7[%c0_10, %c0_11] : memref<8x1xf32, #tpu.memory_space<vmem>>, vector<8x1xf32>
    %13 = arith.mulf %6, %6 : vector<8x256xf32>
    %cst_12 = arith.constant dense<0.000000e+00> : vector<8xf32>
    %14 = vector.multi_reduction <add>, %13, %cst_12 [1] : vector<8x256xf32> to vector<8xf32>
    %15 = vector.shape_cast %14 : vector<8xf32> to vector<8x1xf32>
    %16 = arith.addf %12, %15 : vector<8x1xf32>
    %c0_13 = arith.constant 0 : index
    %c0_14 = arith.constant 0 : index
    %17 = vector.load %arg7[%c0_13, %c0_14] : memref<8x1xf32, #tpu.memory_space<vmem>>, vector<8x1xf32>
    tpu.vector_store %arg7[%c0_13, %c0_14], %16 {strides = array<i32>} : memref<8x1xf32, #tpu.memory_space<vmem>>, vector<8x1xf32>,
    %c0_i32_15 = arith.constant 0 : i32
    %18 = arith.cmpi eq, %arg1, %c0_i32_15 : i32
    %19 = arith.extui %18 : i1 to i32
    %c0_i32_16 = arith.constant 0 : i32
    %20 = arith.cmpi ne, %19, %c0_i32_16 : i32
    scf.if %20 {
      %c0_17 = arith.constant 0 : index
      %c0_18 = arith.constant 0 : index
      %21 = vector.load %arg6[%c0_17, %c0_18] : memref<8x1xf32, #tpu.memory_space<vmem>>, vector<8x1xf32>
      %c0_19 = arith.constant 0 : index
      %c0_20 = arith.constant 0 : index
      %c0_21 = arith.constant 0 : index
      %22 = vector.load %arg4[%c0_19, %c0_20, %c0_21] : memref<1x8x1xf32, #tpu.memory_space<vmem>>, vector<1x8x1xf32>
      %23 = vector.shape_cast %22 : vector<1x8x1xf32> to vector<8x1xf32>
      %24 = vector.shape_cast %21 : vector<8x1xf32> to vector<1x8x1xf32>
      tpu.vector_store %arg4[%c0_19, %c0_20, %c0_21], %24 {strides = array<i32>} : memref<1x8x1xf32, #tpu.memory_space<vmem>>, vector<1x8x1xf32>,
      %c0_22 = arith.constant 0 : index
      %c0_23 = arith.constant 0 : index
      %25 = vector.load %arg7[%c0_22, %c0_23] : memref<8x1xf32, #tpu.memory_space<vmem>>, vector<8x1xf32>
      %c0_24 = arith.constant 0 : index
      %c0_25 = arith.constant 0 : index
      %c0_26 = arith.constant 0 : index
      %26 = vector.load %arg5[%c0_24, %c0_25, %c0_26] : memref<1x8x1xf32, #tpu.memory_space<vmem>>, vector<1x8x1xf32>
      %27 = vector.shape_cast %26 : vector<1x8x1xf32> to vector<8x1xf32>
      %28 = vector.shape_cast %25 : vector<8x1xf32> to vector<1x8x1xf32>
      tpu.vector_store %arg5[%c0_24, %c0_25, %c0_26], %28 {strides = array<i32>} : memref<1x8x1xf32, #tpu.memory_space<vmem>>, vector<1x8x1xf32>,
    } else {
    }
    return
  }
  func.func @transform_0(%arg0: i32, %arg1: i32) -> (i32, i32, i32) {
    %c0_i32 = arith.constant 0 : i32
    %c0_i32_0 = arith.constant 0 : i32
    return %arg0, %c0_i32, %arg1 : i32, i32, i32
  }
  func.func @transform_1(%arg0: i32, %arg1: i32) -> (i32, i32) {
    %c0_i32 = arith.constant 0 : i32
    %c0_i32_0 = arith.constant 0 : i32
    %c0_i32_1 = arith.constant 0 : i32
    return %c0_i32, %c0_i32_0 : i32, i32
  }
  func.func @transform_2(%arg0: i32, %arg1: i32) -> (i32, i32, i32) {
    %c0_i32 = arith.constant 0 : i32
    %c0_i32_0 = arith.constant 0 : i32
    %c0_i32_1 = arith.constant 0 : i32
    return %arg0, %c0_i32, %c0_i32_0 : i32, i32, i32
  }
  func.func @transform_3(%arg0: i32, %arg1: i32) -> (i32, i32, i32) {
    %c0_i32 = arith.constant 0 : i32
    %c0_i32_0 = arith.constant 0 : i32
    %c0_i32_1 = arith.constant 0 : i32
    return %arg0, %c0_i32, %c0_i32_0 : i32, i32, i32
  }
}

module attributes {stable_mosaic.version = 11 : i64} {
  func.func @_conv_bn_kernel(%arg0: i32, %arg1: i32, %arg2: memref<1x4x256xf32, #tpu.memory_space<vmem>>, %arg3: memref<8x4xf32, #tpu.memory_space<vmem>>, %arg4: memref<8x1xf32, #tpu.memory_space<vmem>>, %arg5: memref<1x8x256xf32, #tpu.memory_space<vmem>>) attributes {dimension_semantics = [#tpu.dimension_semantics<parallel>, #tpu.dimension_semantics<parallel>], iteration_bounds = array<i64: 2, 1>, scalar_prefetch = 0 : i64, scratch_operands = 0 : i64, tpu.core_type = #tpu.core_type<tc>, window_params = [{transform_indices = @transform_0, window_bounds = array<i64: 1, 4, 256>}, {pipeline_mode = #tpu.pipeline_mode<synchronous>, transform_indices = @transform_1, window_bounds = array<i64: 8, 4>}, {pipeline_mode = #tpu.pipeline_mode<synchronous>, transform_indices = @transform_2, window_bounds = array<i64: 8, 1>}, {transform_indices = @transform_3, window_bounds = array<i64: 1, 8, 256>}]} {
    %c0 = arith.constant 0 : index
    %c0_0 = arith.constant 0 : index
    %0 = vector.load %arg3[%c0, %c0_0] : memref<8x4xf32, #tpu.memory_space<vmem>>, vector<8x4xf32>
    %c0_1 = arith.constant 0 : index
    %c0_2 = arith.constant 0 : index
    %c0_3 = arith.constant 0 : index
    %1 = vector.load %arg2[%c0_1, %c0_2, %c0_3] : memref<1x4x256xf32, #tpu.memory_space<vmem>>, vector<1x4x256xf32>
    %2 = vector.shape_cast %1 : vector<1x4x256xf32> to vector<4x256xf32>
    %cst = arith.constant dense<0.000000e+00> : vector<8x256xf32>
    %3 = tpu.matmul %0, %2, %cst {dimension_numbers = #tpu.dot_dimension_numbers<[1], [0], [0], [1], [0, 0, 1, 1], [], []>} : vector<8x4xf32>, vector<4x256xf32>, vector<8x256xf32> -> vector<8x256xf32>
    %c0_4 = arith.constant 0 : index
    %c0_5 = arith.constant 0 : index
    %4 = vector.load %arg4[%c0_4, %c0_5] : memref<8x1xf32, #tpu.memory_space<vmem>>, vector<8x1xf32>
    %5 = vector.broadcast %4 : vector<8x1xf32> to vector<8x256xf32>
    %6 = arith.addf %3, %5 : vector<8x256xf32>
    %c0_6 = arith.constant 0 : index
    %c0_7 = arith.constant 0 : index
    %c0_8 = arith.constant 0 : index
    %7 = vector.load %arg5[%c0_6, %c0_7, %c0_8] : memref<1x8x256xf32, #tpu.memory_space<vmem>>, vector<1x8x256xf32>
    %8 = vector.shape_cast %7 : vector<1x8x256xf32> to vector<8x256xf32>
    %9 = vector.shape_cast %6 : vector<8x256xf32> to vector<1x8x256xf32>
    tpu.vector_store %arg5[%c0_6, %c0_7, %c0_8], %9 {strides = array<i32>} : memref<1x8x256xf32, #tpu.memory_space<vmem>>, vector<1x8x256xf32>,
    return
  }
  func.func @transform_0(%arg0: i32, %arg1: i32) -> (i32, i32, i32) {
    %c0_i32 = arith.constant 0 : i32
    %c0_i32_0 = arith.constant 0 : i32
    return %arg0, %c0_i32, %arg1 : i32, i32, i32
  }
  func.func @transform_1(%arg0: i32, %arg1: i32) -> (i32, i32) {
    %c0_i32 = arith.constant 0 : i32
    %c0_i32_0 = arith.constant 0 : i32
    %c0_i32_1 = arith.constant 0 : i32
    return %c0_i32, %c0_i32_0 : i32, i32
  }
  func.func @transform_2(%arg0: i32, %arg1: i32) -> (i32, i32) {
    %c0_i32 = arith.constant 0 : i32
    %c0_i32_0 = arith.constant 0 : i32
    %c0_i32_1 = arith.constant 0 : i32
    return %c0_i32, %c0_i32_0 : i32, i32
  }
  func.func @transform_3(%arg0: i32, %arg1: i32) -> (i32, i32, i32) {
    %c0_i32 = arith.constant 0 : i32
    %c0_i32_0 = arith.constant 0 : i32
    return %arg0, %c0_i32, %arg1 : i32, i32, i32
  }
}

</mosaic_0001>

<llo_original>
// kernel: resample_channels_forward.3
$region0: #{resample_channels_forward.3}
  #allocation0 [shape = 'u32[]', space=smem, size = 0x4, offset = 0x4, fixed_abs, tag = 'smem constant byte address 0x4 - core index']
  #allocation1 [shape = 'u32[72,128]{1,0:T(1,128)}', space=vmem, size = 0x9000, scoped, tag = 'internal scratch']
  %s0 = inlined_call_operand.vmem [shape: f32[2,4,256], index: 0, kind: input, shape index: {}]
  %s1 = inlined_call_operand.vmem [shape: f32[8,4], index: 1, kind: input, shape index: {}]
  %s2 = inlined_call_operand.vmem [shape: f32[8,1], index: 2, kind: input, shape index: {}]
  %s3 = inlined_call_operand.vmem [shape: f32[2,8,256], index: 3, kind: output, shape index: {}]
  %s4 = sld [smem:[#allocation0]]
  $region45: #{resample_channels_forward.3} parent=0
    _
  %s6 = ssub.s32 1, %s4
  %s7 = scalar_select 0, %s6, %s4
  loop: start=0, step=1, limit=4
  $region2: #{resample_channels_forward.3} parent=0 // loop_pre_header
    _
  $region3: #{resample_channels_forward.3} parent=0 // loop_header
    %s9 = sphi 0, %s13
    %p10 = scmp.ge.s32.totalorder %s9, 4
    %s16 = sphi 0, %s28
    %s17 = sphi 0, %s24
    %s18 = sphi 0, %s16
    %s19 = sphi 0, %s17
    %s20 = sphi 0, %s18
    %s21 = sphi 0, %s19
    %s33 = sphi 0, %s35
    %s36 = sphi 0, %s33
    %s37 = sphi 0, %s36
    %s53 = sphi 0, %s37
    %s57 = sphi 0, %s57
    %s59 = sphi 0, %s57
    %s60 = sphi 0, %s59
    %s74 = sphi 0, %s60
    %s78 = sphi 0, %s78
    %s80 = sphi 0, %s78
    %s81 = sphi 0, %s80
    %s95 = sphi 0, %s81
    %s103 = sphi 0, %s105
    %s106 = sphi 0, %s103
    %s107 = sphi 0, %s106
    %s123 = sphi 0, %s107
  $region4: #{resample_channels_forward.3} parent=0 // loop_header_branch
    %12 = sbr.rel (%p10) target = $region8
  $region5: #{resample_channels_forward.3} parent=0 // loop_body
    %s14 = ssub.s32 %s9, 1
    %s15 = ssub.s32 %s9, 2
    %s22 = sadd.s32 1, %s17
    %p23 = scmp.ge.s32.totalorder %s22, 1
    %s24 = scalar_select %p23, 0, %s22
    %s25 = sadd.s32 1, %s16
    %s26 = scalar_select %p23, %s25, %s16
    %p27 = scmp.ge.s32.totalorder %s26, 2
    %s28 = scalar_select %p27, 0, %s26
    %s29 = ssub.s32 %s16, %s28
    %s30 = ssub.s32 %s17, %s24
    %s31 = sor.u32 %s29, %s30
    %p32 = scmp.eq.s32.totalorder %s31, 0
    %s34 = sadd.s32 %s33, 1
    %s35 = scalar_select %p32, %s33, %s34
    %p38 = pneg %p32
    %p39 = scmp.eq.s32.totalorder %s9, 1
    %p40 = por %p38, %p39
    %p41 = scmp.ne.s32.totalorder %s33, %s36
    %p42 = scmp.eq.s32.totalorder %s9, 0
    %p43 = por %p41, %p42
    %p44 = scmp.ne.s32.totalorder %s33, %s36
    %p45 = scmp.eq.s32.totalorder %s14, 1
    %p46 = por %p44, %p45
    %p47 = scmp.ne.s32.totalorder %s36, %s37
    %p48 = scmp.eq.s32.totalorder %s14, 0
    %p49 = por %p47, %p48
    %p50 = scmp.ne.s32.totalorder %s36, %s37
    %p51 = scmp.eq.s32.totalorder %s15, 1
    %p52 = por %p50, %p51
    %p54 = scmp.ne.s32.totalorder %s37, %s53
    %p55 = scmp.eq.s32.totalorder %s15, 0
    %p56 = por %p54, %p55
    %s58 = sadd.s32 %s57, 1
    %p61 = scmp.eq.s32.totalorder %s9, 1
    %p62 = scmp.ne.s32.totalorder %s57, %s59
    %p63 = scmp.eq.s32.totalorder %s9, 0
    %p64 = por %p62, %p63
    %p65 = scmp.ne.s32.totalorder %s57, %s59
    %p66 = scmp.eq.s32.totalorder %s14, 1
    %p67 = por %p65, %p66
    %p68 = scmp.ne.s32.totalorder %s59, %s60
    %p69 = scmp.eq.s32.totalorder %s14, 0
    %p70 = por %p68, %p69
    %p71 = scmp.ne.s32.totalorder %s59, %s60
    %p72 = scmp.eq.s32.totalorder %s15, 1
    %p73 = por %p71, %p72
    %p75 = scmp.ne.s32.totalorder %s60, %s74
    %p76 = scmp.eq.s32.totalorder %s15, 0
    %p77 = por %p75, %p76
    %s79 = sadd.s32 %s78, 1
    %p82 = scmp.eq.s32.totalorder %s9, 1
    %p83 = scmp.ne.s32.totalorder %s78, %s80
    %p84 = scmp.eq.s32.totalorder %s9, 0
    %p85 = por %p83, %p84
    %p86 = scmp.ne.s32.totalorder %s78, %s80
    %p87 = scmp.eq.s32.totalorder %s14, 1
    %p88 = por %p86, %p87
    %p89 = scmp.ne.s32.totalorder %s80, %s81
    %p90 = scmp.eq.s32.totalorder %s14, 0
    %p91 = por %p89, %p90
    %p92 = scmp.ne.s32.totalorder %s80, %s81
    %p93 = scmp.eq.s32.totalorder %s15, 1
    %p94 = por %p92, %p93
    %p96 = scmp.ne.s32.totalorder %s81, %s95
    %p97 = scmp.eq.s32.totalorder %s15, 0
    %p98 = por %p96, %p97
    %s99 = ssub.s32 %s16, %s28
    %s100 = ssub.s32 %s17, %s24
    %s101 = sor.u32 %s99, %s100
    %p102 = scmp.eq.s32.totalorder %s101, 0
    %s104 = sadd.s32 %s103, 1
    %s105 = scalar_select %p102, %s103, %s104
    %p108 = pneg %p102
    %p109 = scmp.eq.s32.totalorder %s9, 1
    %p110 = por %p108, %p109
    %p111 = scmp.ne.s32.totalorder %s103, %s106
    %p112 = scmp.eq.s32.totalorder %s9, 0
    %p113 = por %p111, %p112
    %p114 = scmp.ne.s32.totalorder %s103, %s106
    %p115 = scmp.eq.s32.totalorder %s14, 1
    %p116 = por %p114, %p115
    %p117 = scmp.ne.s32.totalorder %s106, %s107
    %p118 = scmp.eq.s32.totalorder %s14, 0
    %p119 = por %p117, %p118
    %p120 = scmp.ne.s32.totalorder %s106, %s107
    %p121 = scmp.eq.s32.totalorder %s15, 1
    %p122 = por %p120, %p121
    %p124 = scmp.ne.s32.totalorder %s107, %s123
    %p125 = scmp.eq.s32.totalorder %s15, 0
    %p126 = por %p124, %p125
    %p127 = scmp.le.s32.totalorder 1, %s9
    %p128 = scmp.lt.s32.totalorder %s9, 3
    %p129 = pnand %p127, %p128
    %p130 = pneg %p129
    // Predicated region
    $region9: #{resample_channels_forward.3} parent=5 // pred_check
      _
    $region10: #{resample_channels_forward.3} parent=5 // pred_check_branch
      %132 = sbr.rel (%p129) target = $region12
    $region11: #{resample_channels_forward.3} parent=5 // pred_region
      %s133 = ssub.s32 %s9, 1
      // Predicated region
      $region13: #{resample_channels_forward.3} parent=11 // pred_check
        %p134 = pneg %p70
      $region14: #{resample_channels_forward.3} parent=11 // pred_check_branch
        %136 = sbr.rel (%p134) target = $region16
      $region15: #{resample_channels_forward.3} parent=11 // pred_region
        _
      $region16: #{resample_channels_forward.3} parent=11 // pred_fallthru
        _
      // Predicated region
      $region17: #{resample_channels_forward.3} parent=11 // pred_check
        %p137 = pneg %p91
      $region18: #{resample_channels_forward.3} parent=11 // pred_check_branch
        %139 = sbr.rel (%p137) target = $region20
      $region19: #{resample_channels_forward.3} parent=11 // pred_region
        _
      $region20: #{resample_channels_forward.3} parent=11 // pred_fallthru
        _
    $region12: #{resample_channels_forward.3} parent=5 // pred_fallthru
      _
    %p140 = scmp.lt.s32.totalorder %s9, 2
    // Predicated region
    $region21: #{resample_channels_forward.3} parent=5 // pred_check
      %p141 = pneg %p140
    $region22: #{resample_channels_forward.3} parent=5 // pred_check_branch
      %143 = sbr.rel (%p141) target = $region24
    $region23: #{resample_channels_forward.3} parent=5 // pred_region
      // Predicated region
      $region25: #{resample_channels_forward.3} parent=23 // pred_check
        %p144 = pneg %p43
      $region26: #{resample_channels_forward.3} parent=23 // pred_check_branch
        %146 = sbr.rel (%p144) target = $region28
      $region27: #{resample_channels_forward.3} parent=23 // pred_region
        %s147 = smul.u32 2, %s17
        %p148 = scmp.lt.s32.totalorder %s16, 1
        %s149 = scalar_select %p148, %s16, 1
        %p150 = scmp.lt.s32.totalorder %s147, 1
        %s151 = scalar_select %p150, %s147, 1
        %s152 = smul.addr %s149, 2
        %s153 = sadd.s32 %s151, %s152
        %s154 = smul.addr %s153, 4
        %s155 = scalar_lea.vmem %s0, %s154
        %s156 = smul.u32 2, %s17
      $region28: #{resample_channels_forward.3} parent=23 // pred_fallthru
        _
    $region24: #{resample_channels_forward.3} parent=5 // pred_fallthru
      _
    %p157 = scmp.le.s32.totalorder 1, %s9
    %p158 = scmp.lt.s32.totalorder %s9, 3
    %p159 = pnand %p157, %p158
    %p160 = pneg %p159
    // Predicated region
    $region29: #{resample_channels_forward.3} parent=5 // pred_check
      _
    $region30: #{resample_channels_forward.3} parent=5 // pred_check_branch
      %162 = sbr.rel (%p159) target = $region32
    $region31: #{resample_channels_forward.3} parent=5 // pred_region
      %s163 = ssub.s32 %s9, 1
      %s164 = smul.u32 2, %s19
      %p165 = scmp.lt.s32.totalorder %s18, 1
      %s166 = scalar_select %p165, %s18, 1
      %p167 = scmp.lt.s32.totalorder %s164, 1
      %s168 = scalar_select %p167, %s164, 1
      %s169 = smul.addr %s166, 2
      %s170 = sadd.s32 %s168, %s169
      %s171 = smul.addr %s170, 4
      %s172 = scalar_lea.vmem %s0, %s171
      %p173 = pneg %p49
      %p174 = pneg %p46
      %p175 = pneg %p70
      %p176 = pneg %p67
      %p177 = pneg %p91
      %p178 = pneg %p88
      %p179 = pneg %p119
      %p180 = pneg %p116
      %s181 = smul.u32 2, %s19
      %p182 = scmp.lt.s32.totalorder %s18, 1
      %s183 = scalar_select %p182, %s18, 1
      %p184 = scmp.lt.s32.totalorder %s181, 1
      %s185 = scalar_select %p184, %s181, 1
      %s186 = smul.addr %s183, 2
      %s187 = sadd.s32 %s185, %s186
      %s188 = smul.addr %s187, 8
      %s189 = scalar_lea.vmem %s3, %s188
      %s190 = smul.u32 2, %s19
      %p191 = scmp.lt.s32.totalorder %s18, 1
      %s192 = scalar_select %p191, %s18, 1
      %p193 = scmp.lt.s32.totalorder %s190, 1
      %s194 = scalar_select %p193, %s190, 1
      %s195 = smul.addr %s192, 2
      %s196 = sadd.s32 %s194, %s195
      %s197 = smul.addr %s196, 4
      %s198 = scalar_lea.vmem %s0, %s197
      %s199 = smul.u32 2, %s19
      %s200 = smul.u32 2, %s19
      %p201 = scmp.lt.s32.totalorder %s18, 1
      %s202 = scalar_select %p201, %s18, 1
      %p203 = scmp.lt.s32.totalorder %s200, 1
      %s204 = scalar_select %p203, %s200, 1
      %s205 = smul.addr %s202, 2
      %s206 = sadd.s32 %s204, %s205
      %s207 = smul.addr %s206, 8
      %s208 = scalar_lea.vmem %s3, %s207
      %s209 = smul.u32 2, %s19
      %v210 = vld [vmem:[%s1] sm:$0xff]
      %v211 = vld [vmem:[%s198] sm:$0xff]
      %v212 = vld [vmem:[%s2] sm:$0xff]
      %214 = vset.pattern.permute.xlu0 0
      %215 = vperm.xlu0 %214, %v212
      %v216 = vpop.permute.xlu0 %215
      %219 = vst [vmem:[#allocation1] ss:$2 sm:$0xff] %v211
      %v220 = vld.sshfl [vmem:[#allocation1] sm:$0xff pattern:$0x75316420]
      %v221 = vld.sshfl [vmem:[#allocation1 + $0x8] sm:$0xff pattern:$0x75316420]
      %vm222 = vcmask 31744
      %v224 = vsel %vm222, %v210, 0
      %vm226 = vcmask 1043456
      %v227 = vsel %vm226, %v220, 0
      %v229 = vsel %vm226, %v221, 0
      %231 = vmatpush.msra.mxu0 0.0
      %232 = vmatpush.msra.mxu0 0.0
      %233 = vmatpush.msra.mxu0 0.0
      %234 = vmatpush.msra.mxu0 0.0
      %235 = vmatpush.msra.mxu0 0.0
      %236 = vmatpush.msra.mxu0 0.0
      %237 = vmatpush.msra.mxu0 0.0
      %238 = vmatpush.msra.mxu0 0.0
      %239 = vmatpush.msra.mxu0 0.0
      %240 = vmatpush.msra.mxu0 0.0
      %241 = vmatpush.msra.mxu0 0.0
      %242 = vmatpush.msra.mxu0 0.0
      %243 = vmatpush.msra.mxu0 0.0
      %244 = vmatpush.msra.mxu0 0.0
      %245 = vmatpush.msra.mxu0 0.0
      %246 = vmatpush.msra.mxu0 %v227
      %247 = vmatmul.f32.gmra.mxu0 %v224
      %v248 = vpop.f32.mrf.mxu0
      %v249 = vadd.f32 %v216, %v248
      %250 = vdwg.mxu0
      %251 = vmatpush.msra.mxu0 0.0
      %252 = vmatpush.msra.mxu0 0.0
      %253 = vmatpush.msra.mxu0 0.0
      %254 = vmatpush.msra.mxu0 0.0
      %255 = vmatpush.msra.mxu0 0.0
      %256 = vmatpush.msra.mxu0 0.0
      %257 = vmatpush.msra.mxu0 0.0
      %258 = vmatpush.msra.mxu0 0.0
      %259 = vmatpush.msra.mxu0 0.0
      %260 = vmatpush.msra.mxu0 0.0
      %261 = vmatpush.msra.mxu0 0.0
      %262 = vmatpush.msra.mxu0 0.0
      %263 = vmatpush.msra.mxu0 0.0
      %264 = vmatpush.msra.mxu0 0.0
      %265 = vmatpush.msra.mxu0 0.0
      %266 = vmatpush.msra.mxu0 %v229
      %267 = vmatmul.f32.gmra.mxu0 %v224
      %v268 = vpop.f32.mrf.mxu0
      %v269 = vadd.f32 %v216, %v268
      %270 = vdwg.mxu0
      %271 = vst [vmem:[%s208] sm:$0xff] %v249
      %272 = vst [vmem:[%s208 + $0x8] sm:$0xff] %v269
      %s273 = smul.u32 2, %s19
      %p274 = scmp.lt.s32.totalorder %s18, 1
      %s275 = scalar_select %p274, %s18, 1
      %p276 = scmp.lt.s32.totalorder %s273, 1
      %s277 = scalar_select %p276, %s273, 1
      %s278 = smul.addr %s275, 2
      %s279 = sadd.s32 %s277, %s278
      %s280 = smul.addr %s279, 8
      %s281 = scalar_lea.vmem %s3, %s280
      // Predicated region
      $region33: #{resample_channels_forward.3} parent=31 // pred_check
        %p282 = pneg %p116
      $region34: #{resample_channels_forward.3} parent=31 // pred_check_branch
        %284 = sbr.rel (%p282) target = $region36
      $region35: #{resample_channels_forward.3} parent=31 // pred_region
        %s285 = smul.u32 2, %s19
      $region36: #{resample_channels_forward.3} parent=31 // pred_fallthru
        _
    $region32: #{resample_channels_forward.3} parent=5 // pred_fallthru
      _
    %p286 = scmp.le.s32.totalorder 2, %s9
    // Predicated region
    $region37: #{resample_channels_forward.3} parent=5 // pred_check
      %p287 = pneg %p286
    $region38: #{resample_channels_forward.3} parent=5 // pred_check_branch
      %289 = sbr.rel (%p287) target = $region40
    $region39: #{resample_channels_forward.3} parent=5 // pred_region
      %s290 = ssub.s32 %s9, 2
      // Predicated region
      $region41: #{resample_channels_forward.3} parent=39 // pred_check
        %p291 = pneg %p122
      $region42: #{resample_channels_forward.3} parent=39 // pred_check_branch
        %293 = sbr.rel (%p291) target = $region44
      $region43: #{resample_channels_forward.3} parent=39 // pred_region
        %s294 = smul.u32 2, %s21
        %p295 = scmp.lt.s32.totalorder %s20, 1
        %s296 = scalar_select %p295, %s20, 1
        %p297 = scmp.lt.s32.totalorder %s294, 1
        %s298 = scalar_select %p297, %s294, 1
        %s299 = smul.addr %s296, 2
        %s300 = sadd.s32 %s298, %s299
        %s301 = smul.addr %s300, 8
        %s302 = scalar_lea.vmem %s3, %s301
      $region44: #{resample_channels_forward.3} parent=39 // pred_fallthru
        _
    $region40: #{resample_channels_forward.3} parent=5 // pred_fallthru
      _
  $region6: #{resample_channels_forward.3} parent=0 // loop_footer
    %s13 = sadd.s32 1, %s9
  $region7: #{resample_channels_forward.3} parent=0 // loop_footer_branch
    %8 = sbr.rel target = $region3
  $region8: #{resample_channels_forward.3} parent=0 // loop_exit
    _

// kernel: resample_channels_forward.2
$region0: #{resample_channels_forward.2}
  #allocation0 [shape = 'u32[]', space=smem, size = 0x4, offset = 0x4, fixed_abs, tag = 'smem constant byte address 0x4 - core index']
  #allocation1 [shape = 'u32[72,128]{1,0:T(1,128)}', space=vmem, size = 0x9000, scoped, tag = 'internal scratch']
  #allocation2 [shape = 'f32[8,1]{1,0:T(8,128)}', space=vmem, size = 0x1000, scoped, tag = 'scratch operand']
  #allocation3 [shape = 'f32[8,1]{1,0:T(8,128)}', space=vmem, size = 0x1000, scoped, tag = 'scratch operand']
  %s0 = inlined_call_operand.vmem [shape: f32[2,4,256], index: 0, kind: input, shape index: {}]
  %s1 = inlined_call_operand.vmem [shape: f32[8,4], index: 1, kind: input, shape index: {}]
  %s2 = inlined_call_operand.vmem [shape: f32[2,8,1], index: 2, kind: output, shape index: {0}]
  %s3 = inlined_call_operand.vmem [shape: f32[2,8,1], index: 3, kind: output, shape index: {1}]
  %4 = xla_tuple %s2, %s3
  %s5 = sld [smem:[#allocation0]]
  $region57: #{resample_channels_forward.2} parent=0
    _
  %s7 = ssub.s32 1, %s5
  %s8 = scalar_select 0, %s7, %s5
  loop: start=0, step=1, limit=4
  $region2: #{resample_channels_forward.2} parent=0 // loop_pre_header
    _
  $region3: #{resample_channels_forward.2} parent=0 // loop_header
    %s10 = sphi 0, %s14
    %p11 = scmp.ge.s32.totalorder %s10, 4
    %s17 = sphi 0, %s29
    %s18 = sphi 0, %s25
    %s19 = sphi 0, %s17
    %s20 = sphi 0, %s18
    %s21 = sphi 0, %s19
    %s22 = sphi 0, %s20
    %s34 = sphi 0, %s36
    %s37 = sphi 0, %s34
    %s38 = sphi 0, %s37
    %s54 = sphi 0, %s38
    %s58 = sphi 0, %s58
    %s60 = sphi 0, %s58
    %s61 = sphi 0, %s60
    %s75 = sphi 0, %s61
    %s81 = sphi 0, %s83
    %s84 = sphi 0, %s81
    %s85 = sphi 0, %s84
    %s101 = sphi 0, %s85
    %s107 = sphi 0, %s109
    %s110 = sphi 0, %s107
    %s111 = sphi 0, %s110
    %s127 = sphi 0, %s111
  $region4: #{resample_channels_forward.2} parent=0 // loop_header_branch
    %13 = sbr.rel (%p11) target = $region8
  $region5: #{resample_channels_forward.2} parent=0 // loop_body
    %s15 = ssub.s32 %s10, 1
    %s16 = ssub.s32 %s10, 2
    %s23 = sadd.s32 1, %s18
    %p24 = scmp.ge.s32.totalorder %s23, 1
    %s25 = scalar_select %p24, 0, %s23
    %s26 = sadd.s32 1, %s17
    %s27 = scalar_select %p24, %s26, %s17
    %p28 = scmp.ge.s32.totalorder %s27, 2
    %s29 = scalar_select %p28, 0, %s27
    %s30 = ssub.s32 %s17, %s29
    %s31 = ssub.s32 %s18, %s25
    %s32 = sor.u32 %s30, %s31
    %p33 = scmp.eq.s32.totalorder %s32, 0
    %s35 = sadd.s32 %s34, 1
    %s36 = scalar_select %p33, %s34, %s35
    %p39 = pneg %p33
    %p40 = scmp.eq.s32.totalorder %s10, 1
    %p41 = por %p39, %p40
    %p42 = scmp.ne.s32.totalorder %s34, %s37
    %p43 = scmp.eq.s32.totalorder %s10, 0
    %p44 = por %p42, %p43
    %p45 = scmp.ne.s32.totalorder %s34, %s37
    %p46 = scmp.eq.s32.totalorder %s15, 1
    %p47 = por %p45, %p46
    %p48 = scmp.ne.s32.totalorder %s37, %s38
    %p49 = scmp.eq.s32.totalorder %s15, 0
    %p50 = por %p48, %p49
    %p51 = scmp.ne.s32.totalorder %s37, %s38
    %p52 = scmp.eq.s32.totalorder %s16, 1
    %p53 = por %p51, %p52
    %p55 = scmp.ne.s32.totalorder %s38, %s54
    %p56 = scmp.eq.s32.totalorder %s16, 0
    %p57 = por %p55, %p56
    %s59 = sadd.s32 %s58, 1
    %p62 = scmp.eq.s32.totalorder %s10, 1
    %p63 = scmp.ne.s32.totalorder %s58, %s60
    %p64 = scmp.eq.s32.totalorder %s10, 0
    %p65 = por %p63, %p64
    %p66 = scmp.ne.s32.totalorder %s58, %s60
    %p67 = scmp.eq.s32.totalorder %s15, 1
    %p68 = por %p66, %p67
    %p69 = scmp.ne.s32.totalorder %s60, %s61
    %p70 = scmp.eq.s32.totalorder %s15, 0
    %p71 = por %p69, %p70
    %p72 = scmp.ne.s32.totalorder %s60, %s61
    %p73 = scmp.eq.s32.totalorder %s16, 1
    %p74 = por %p72, %p73
    %p76 = scmp.ne.s32.totalorder %s61, %s75
    %p77 = scmp.eq.s32.totalorder %s16, 0
    %p78 = por %p76, %p77
    %s79 = ssub.s32 %s17, %s29
    %p80 = scmp.eq.s32.totalorder %s79, 0
    %s82 = sadd.s32 %s81, 1
    %s83 = scalar_select %p80, %s81, %s82
    %p86 = pneg %p80
    %p87 = scmp.eq.s32.totalorder %s10, 1
    %p88 = por %p86, %p87
    %p89 = scmp.ne.s32.totalorder %s81, %s84
    %p90 = scmp.eq.s32.totalorder %s10, 0
    %p91 = por %p89, %p90
    %p92 = scmp.ne.s32.totalorder %s81, %s84
    %p93 = scmp.eq.s32.totalorder %s15, 1
    %p94 = por %p92, %p93
    %p95 = scmp.ne.s32.totalorder %s84, %s85
    %p96 = scmp.eq.s32.totalorder %s15, 0
    %p97 = por %p95, %p96
    %p98 = scmp.ne.s32.totalorder %s84, %s85
    %p99 = scmp.eq.s32.totalorder %s16, 1
    %p100 = por %p98, %p99
    %p102 = scmp.ne.s32.totalorder %s85, %s101
    %p103 = scmp.eq.s32.totalorder %s16, 0
    %p104 = por %p102, %p103
    %s105 = ssub.s32 %s17, %s29
    %p106 = scmp.eq.s32.totalorder %s105, 0
    %s108 = sadd.s32 %s107, 1
    %s109 = scalar_select %p106, %s107, %s108
    %p112 = pneg %p106
    %p113 = scmp.eq.s32.totalorder %s10, 1
    %p114 = por %p112, %p113
    %p115 = scmp.ne.s32.totalorder %s107, %s110
    %p116 = scmp.eq.s32.totalorder %s10, 0
    %p117 = por %p115, %p116
    %p118 = scmp.ne.s32.totalorder %s107, %s110
    %p119 = scmp.eq.s32.totalorder %s15, 1
    %p120 = por %p118, %p119
    %p121 = scmp.ne.s32.totalorder %s110, %s111
    %p122 = scmp.eq.s32.totalorder %s15, 0
    %p123 = por %p121, %p122
    %p124 = scmp.ne.s32.totalorder %s110, %s111
    %p125 = scmp.eq.s32.totalorder %s16, 1
    %p126 = por %p124, %p125
    %p128 = scmp.ne.s32.totalorder %s111, %s127
    %p129 = scmp.eq.s32.totalorder %s16, 0
    %p130 = por %p128, %p129
    %p131 = scmp.le.s32.totalorder 1, %s10
    %p132 = scmp.lt.s32.totalorder %s10, 3
    %p133 = pnand %p131, %p132
    %p134 = pneg %p133
    // Predicated region
    $region9: #{resample_channels_forward.2} parent=5 // pred_check
      _
    $region10: #{resample_channels_forward.2} parent=5 // pred_check_branch
      %136 = sbr.rel (%p133) target = $region12
    $region11: #{resample_channels_forward.2} parent=5 // pred_region
      %s137 = ssub.s32 %s10, 1
      // Predicated region
      $region13: #{resample_channels_forward.2} parent=11 // pred_check
        %p138 = pneg %p71
      $region14: #{resample_channels_forward.2} parent=11 // pred_check_branch
        %140 = sbr.rel (%p138) target = $region16
      $region15: #{resample_channels_forward.2} parent=11 // pred_region
        _
      $region16: #{resample_channels_forward.2} parent=11 // pred_fallthru
        _
    $region12: #{resample_channels_forward.2} parent=5 // pred_fallthru
      _
    %p141 = scmp.lt.s32.totalorder %s10, 2
    // Predicated region
    $region17: #{resample_channels_forward.2} parent=5 // pred_check
      %p142 = pneg %p141
    $region18: #{resample_channels_forward.2} parent=5 // pred_check_branch
      %144 = sbr.rel (%p142) target = $region20
    $region19: #{resample_channels_forward.2} parent=5 // pred_region
      // Predicated region
      $region21: #{resample_channels_forward.2} parent=19 // pred_check
        %p145 = pneg %p44
      $region22: #{resample_channels_forward.2} parent=19 // pred_check_branch
        %147 = sbr.rel (%p145) target = $region24
      $region23: #{resample_channels_forward.2} parent=19 // pred_region
        %s148 = smul.u32 2, %s18
        %p149 = scmp.lt.s32.totalorder %s17, 1
        %s150 = scalar_select %p149, %s17, 1
        %p151 = scmp.lt.s32.totalorder %s148, 1
        %s152 = scalar_select %p151, %s148, 1
        %s153 = smul.addr %s150, 2
        %s154 = sadd.s32 %s152, %s153
        %s155 = smul.addr %s154, 4
        %s156 = scalar_lea.vmem %s0, %s155
        %s157 = smul.u32 2, %s18
      $region24: #{resample_channels_forward.2} parent=19 // pred_fallthru
        _
    $region20: #{resample_channels_forward.2} parent=5 // pred_fallthru
      _
    %p158 = scmp.le.s32.totalorder 1, %s10
    %p159 = scmp.lt.s32.totalorder %s10, 3
    %p160 = pnand %p158, %p159
    %p161 = pneg %p160
    // Predicated region
    $region25: #{resample_channels_forward.2} parent=5 // pred_check
      _
    $region26: #{resample_channels_forward.2} parent=5 // pred_check_branch
      %163 = sbr.rel (%p160) target = $region28
    $region27: #{resample_channels_forward.2} parent=5 // pred_region
      %s164 = ssub.s32 %s10, 1
      %s165 = smul.u32 2, %s20
      %p166 = scmp.lt.s32.totalorder %s19, 1
      %s167 = scalar_select %p166, %s19, 1
      %p168 = scmp.lt.s32.totalorder %s165, 1
      %s169 = scalar_select %p168, %s165, 1
      %s170 = smul.addr %s167, 2
      %s171 = sadd.s32 %s169, %s170
      %s172 = smul.addr %s171, 4
      %s173 = scalar_lea.vmem %s0, %s172
      %p174 = pneg %p50
      %p175 = pneg %p47
      %p176 = pneg %p71
      %p177 = pneg %p68
      %p178 = pneg %p97
      %p179 = pneg %p94
      %p180 = scmp.lt.s32.totalorder %s19, 1
      %s181 = scalar_select %p180, %s19, 1
      %s182 = smul.addr %s181, 8
      %s183 = scalar_lea.vmem %s2, %s182
      %p184 = pneg %p123
      %p185 = pneg %p120
      %p186 = scmp.lt.s32.totalorder %s19, 1
      %s187 = scalar_select %p186, %s19, 1
      %s188 = smul.addr %s187, 8
      %s189 = scalar_lea.vmem %s3, %s188
      %s190 = smul.u32 2, %s20
      %p191 = scmp.lt.s32.totalorder %s19, 1
      %s192 = scalar_select %p191, %s19, 1
      %p193 = scmp.lt.s32.totalorder %s190, 1
      %s194 = scalar_select %p193, %s190, 1
      %s195 = smul.addr %s192, 2
      %s196 = sadd.s32 %s194, %s195
      %s197 = smul.addr %s196, 4
      %s198 = scalar_lea.vmem %s0, %s197
      %s199 = smul.u32 2, %s20
      %p200 = scmp.lt.s32.totalorder %s19, 1
      %s201 = scalar_select %p200, %s19, 1
      %s202 = smul.addr %s201, 8
      %s203 = scalar_lea.vmem %s2, %s202
      %p204 = scmp.lt.s32.totalorder %s19, 1
      %s205 = scalar_select %p204, %s19, 1
      %s206 = smul.addr %s205, 8
      %s207 = scalar_lea.vmem %s3, %s206
      %p208 = scmp.eq.s32.totalorder %s20, 0
      // Predicated region
      $region29: #{resample_channels_forward.2} parent=27 // pred_check
        %p209 = pneg %p208
      $region30: #{resample_channels_forward.2} parent=27 // pred_check_branch
        %211 = sbr.rel (%p209) target = $region32
      $region31: #{resample_channels_forward.2} parent=27 // pred_region
        %vm212 = vcmask 7168
        %213 = vst.msk [vmem:[#allocation2] sm:$0xff] %vm212, 0.0
        %214 = vst.msk [vmem:[#allocation3] sm:$0xff] %vm212, 0.0
      $region32: #{resample_channels_forward.2} parent=27 // pred_fallthru
        _
      %v215 = vld [vmem:[%s1] sm:$0xff]
      %v216 = vld [vmem:[%s198] sm:$0xff]
      %218 = vst [vmem:[#allocation1] ss:$2 sm:$0xff] %v216
      %v219 = vld.sshfl [vmem:[#allocation1] sm:$0xff pattern:$0x75316420]
      %v220 = vld.sshfl [vmem:[#allocation1 + $0x8] sm:$0xff pattern:$0x75316420]
      %vm221 = vcmask 31744
      %v223 = vsel %vm221, %v215, 0
      %vm225 = vcmask 1043456
      %v226 = vsel %vm225, %v219, 0
      %v228 = vsel %vm225, %v220, 0
      %230 = vmatpush.msra.mxu0 0.0
      %231 = vmatpush.msra.mxu0 0.0
      %232 = vmatpush.msra.mxu0 0.0
      %233 = vmatpush.msra.mxu0 0.0
      %234 = vmatpush.msra.mxu0 0.0
      %235 = vmatpush.msra.mxu0 0.0
      %236 = vmatpush.msra.mxu0 0.0
      %237 = vmatpush.msra.mxu0 0.0
      %238 = vmatpush.msra.mxu0 0.0
      %239 = vmatpush.msra.mxu0 0.0
      %240 = vmatpush.msra.mxu0 0.0
      %241 = vmatpush.msra.mxu0 0.0
      %242 = vmatpush.msra.mxu0 0.0
      %243 = vmatpush.msra.mxu0 0.0
      %244 = vmatpush.msra.mxu0 0.0
      %245 = vmatpush.msra.mxu0 %v226
      %246 = vmatmul.f32.gmra.mxu0 %v223
      %v247 = vpop.f32.mrf.mxu0
      %v248 = vadd.f32 0.0, %v247
      %249 = vdwg.mxu0
      %250 = vmatpush.msra.mxu0 0.0
      %251 = vmatpush.msra.mxu0 0.0
      %252 = vmatpush.msra.mxu0 0.0
      %253 = vmatpush.msra.mxu0 0.0
      %254 = vmatpush.msra.mxu0 0.0
      %255 = vmatpush.msra.mxu0 0.0
      %256 = vmatpush.msra.mxu0 0.0
      %257 = vmatpush.msra.mxu0 0.0
      %258 = vmatpush.msra.mxu0 0.0
      %259 = vmatpush.msra.mxu0 0.0
      %260 = vmatpush.msra.mxu0 0.0
      %261 = vmatpush.msra.mxu0 0.0
      %262 = vmatpush.msra.mxu0 0.0
      %263 = vmatpush.msra.mxu0 0.0
      %264 = vmatpush.msra.mxu0 0.0
      %265 = vmatpush.msra.mxu0 %v228
      %266 = vmatmul.f32.gmra.mxu0 %v223
      %v267 = vpop.f32.mrf.mxu0
      %v268 = vadd.f32 0.0, %v267
      %269 = vdwg.mxu0
      %v270 = vld [vmem:[#allocation2] sm:$0xff]
      %v271 = vadd.f32 %v248, %v268
      %272 = vadd.xlane.f32.xlu0 %v271
      %v273 = vpop.xlane.xlu0 %272
      %v274 = vadd.f32 %v270, %v273
      %vm275 = vcmask 7168
      %276 = vst.msk [vmem:[#allocation2] sm:$0xff] %vm275, %v274
      %v277 = vld [vmem:[#allocation3] sm:$0xff]
      %v278 = vmul.f32 %v248, %v248
      %v279 = vmul.f32 %v268, %v268
      %v280 = vadd.f32 %v278, %v279
      %281 = vadd.xlane.f32.xlu0 %v280
      %v282 = vpop.xlane.xlu0 %281
      %v283 = vadd.f32 %v277, %v282
      %284 = vst.msk [vmem:[#allocation3] sm:$0xff] %vm275, %v283
      // Predicated region
      $region33: #{resample_channels_forward.2} parent=27 // pred_check
        %p285 = pneg %p208
      $region34: #{resample_channels_forward.2} parent=27 // pred_check_branch
        %287 = sbr.rel (%p285) target = $region36
      $region35: #{resample_channels_forward.2} parent=27 // pred_region
        %v288 = vld [vmem:[#allocation2] sm:$0xff]
        %289 = vst.msk [vmem:[%s203] sm:$0xff] %vm275, %v288
        %v290 = vld [vmem:[#allocation3] sm:$0xff]
        %291 = vst.msk [vmem:[%s207] sm:$0xff] %vm275, %v290
      $region36: #{resample_channels_forward.2} parent=27 // pred_fallthru
        _
      %p292 = scmp.lt.s32.totalorder %s19, 1
      %s293 = scalar_select %p292, %s19, 1
      %s294 = smul.addr %s293, 8
      %s295 = scalar_lea.vmem %s2, %s294
      %p296 = scmp.lt.s32.totalorder %s19, 1
      %s297 = scalar_select %p296, %s19, 1
      %s298 = smul.addr %s297, 8
      %s299 = scalar_lea.vmem %s3, %s298
      // Predicated region
      $region37: #{resample_channels_forward.2} parent=27 // pred_check
        %p300 = pneg %p94
      $region38: #{resample_channels_forward.2} parent=27 // pred_check_branch
        %302 = sbr.rel (%p300) target = $region40
      $region39: #{resample_channels_forward.2} parent=27 // pred_region
        _
      $region40: #{resample_channels_forward.2} parent=27 // pred_fallthru
        _
      // Predicated region
      $region41: #{resample_channels_forward.2} parent=27 // pred_check
        %p303 = pneg %p120
      $region42: #{resample_channels_forward.2} parent=27 // pred_check_branch
        %305 = sbr.rel (%p303) target = $region44
      $region43: #{resample_channels_forward.2} parent=27 // pred_region
        _
      $region44: #{resample_channels_forward.2} parent=27 // pred_fallthru
        _
    $region28: #{resample_channels_forward.2} parent=5 // pred_fallthru
      _
    %p306 = scmp.le.s32.totalorder 2, %s10
    // Predicated region
    $region45: #{resample_channels_forward.2} parent=5 // pred_check
      %p307 = pneg %p306
    $region46: #{resample_channels_forward.2} parent=5 // pred_check_branch
      %309 = sbr.rel (%p307) target = $region48
    $region47: #{resample_channels_forward.2} parent=5 // pred_region
      %s310 = ssub.s32 %s10, 2
      // Predicated region
      $region49: #{resample_channels_forward.2} parent=47 // pred_check
        %p311 = pneg %p100
      $region50: #{resample_channels_forward.2} parent=47 // pred_check_branch
        %313 = sbr.rel (%p311) target = $region52
      $region51: #{resample_channels_forward.2} parent=47 // pred_region
        %p314 = scmp.lt.s32.totalorder %s21, 1
        %s315 = scalar_select %p314, %s21, 1
        %s316 = smul.addr %s315, 8
        %s317 = scalar_lea.vmem %s2, %s316
      $region52: #{resample_channels_forward.2} parent=47 // pred_fallthru
        _
      // Predicated region
      $region53: #{resample_channels_forward.2} parent=47 // pred_check
        %p318 = pneg %p126
      $region54: #{resample_channels_forward.2} parent=47 // pred_check_branch
        %320 = sbr.rel (%p318) target = $region56
      $region55: #{resample_channels_forward.2} parent=47 // pred_region
        %p321 = scmp.lt.s32.totalorder %s21, 1
        %s322 = scalar_select %p321, %s21, 1
        %s323 = smul.addr %s322, 8
        %s324 = scalar_lea.vmem %s3, %s323
      $region56: #{resample_channels_forward.2} parent=47 // pred_fallthru
        _
    $region48: #{resample_channels_forward.2} parent=5 // pred_fallthru
      _
  $region6: #{resample_channels_forward.2} parent=0 // loop_footer
    %s14 = sadd.s32 1, %s10
  $region7: #{resample_channels_forward.2} parent=0 // loop_footer_branch
    %9 = sbr.rel target = $region3
  $region8: #{resample_channels_forward.2} parent=0 // loop_exit
    _

</llo_original>
